<compile_context>
chip_gen: v6e
topology: v6e:2x2x1
jax: 0.10.0
libtpu: 0.0.40
codegen_flags: <defaults>
</compile_context>

<pallas_src>
import math
import functools

import numpy as np
import jax
import jax.numpy as jnp
from jax import lax
from jax.experimental import pallas as pl
from jax.experimental.pallas import tpu as pltpu


def _num_tensorcores_per_chip() -> int:
    """v7x exposes 2 TensorCores per chip to one Pallas grid (parallel axes shard across
    them); v5e/v6e have 1.  Fall back to 1 if the device kind is unrecognised."""
    try:
        kind = jax.devices()[0].device_kind.lower()
    except Exception:
        return 1
    return 2 if ("v7" in kind or "7x" in kind) else 1


def _choose_num_blocks(batch: int, requested) -> int:
    n = requested if requested is not None else min(batch, _num_tensorcores_per_chip())
    n = max(1, min(int(n), batch))
    while batch % n:
        n -= 1
    return n


def _build_masks(b_blk: int, n_q: int, n_kv: int, d: int, n_heads: int):
    """Trace-time (numpy) constants for the (batch, head) block-diagonal trick.

    Row ordering (head-major): row r -> head = r // (b_blk*n), batch = (r % (b_blk*n)) // n.
    """
    dh = d // n_heads
    r_q = n_heads * b_blk * n_q
    r_kv = n_heads * b_blk * n_kv

    rows_kv = np.arange(r_kv)
    head_kv = rows_kv // (b_blk * n_kv)
    batch_kv = (rows_kv % (b_blk * n_kv)) // n_kv
    lane_head = np.arange(d) // dh
    # 0/1 lane mask: K/V row keeps only its own head's channels.
    kv_lane_mask = (lane_head[None, :] == head_kv[:, None]).astype(np.float32)       # (r_kv, d)

    rows_q = np.arange(r_q)
    head_q = rows_q // (b_blk * n_q)
    batch_q = (rows_q % (b_blk * n_q)) // n_q
    same = (head_q[:, None] == head_kv[None, :]) & (batch_q[:, None] == batch_kv[None, :])
    # additive score bias: 0 on the (batch, head) diagonal blocks, -1e30 elsewhere.
    score_bias = np.where(same, 0.0, -1e30).astype(np.float32)                       # (r_q, r_kv)
    return jnp.asarray(kv_lane_mask), jnp.asarray(score_bias)


def _mha_kernel(xq_ref, xkv_ref, wq_ref, bq_ref, wkv_ref, bkv_ref,
                kvmask_ref, sbias_ref, out_ref, *,
                n_heads: int, compute_dtype, approx_recip: bool):
    # xq_ref:  (B_blk, Nq, d)      xkv_ref: (B_blk, Nkv, d)
    # wq_ref:  (d, d)   PyTorch (out,in) layout, 1/sqrt(d_head) already folded in
    # wkv_ref: (2d, d)  rows = [W_k ; W_v]        bq_ref: (1, d)   bkv_ref: (1, 2d)
    # kvmask_ref: (H*B_blk*Nkv, d) 0/1 lane mask   sbias_ref: (H*B_blk*Nq, H*B_blk*Nkv)
    # out_ref: (B_blk, Nq, d)
    bb, nq, d = xq_ref.shape
    _, nkv, _ = xkv_ref.shape
    h = n_heads
    mq = bb * nq
    mk = bb * nkv

    xq = xq_ref[...].reshape(mq, d)      # free leading-dim merge
    xkv = xkv_ref[...].reshape(mk, d)

    def mm_t(a, b):
        # a @ b.T with fp32 accumulation on the MXU (operands optionally cast to bf16)
        return lax.dot_general(
            a.astype(compute_dtype), b.astype(compute_dtype),
            (((1,), (1,)), ((), ())), preferred_element_type=jnp.float32)

    # ---- fused projections: 2 MXU matmuls for the whole (B_blk*N) row slab ----------------
    q = mm_t(xq, wq_ref[...]) + bq_ref[...]          # (mq, d), already scaled by 1/sqrt(dh)
    kv = mm_t(xkv, wkv_ref[...]) + bkv_ref[...]      # (mk, 2d)
    k = kv[:, :d]
    v = kv[:, d:]   # lane-32 slice -> one cross-lane shift (XLU slot, ~free here); splitting
                    # W_k/W_v back into two matmuls is a wash at d=32 (perf review #8).

    # ---- all (batch, head) pairs via two wide matmuls --------------------------------------
    # Rows are head-major: block hh of k_rows/v_rows holds batch-major K/V with only head hh's
    # lanes kept, so one (H*mq, d) @ (d, H*mk) matmul yields every per-(batch,head) score on
    # its diagonal (nq, nkv) block; everything else is killed by the additive bias.
    kv_mask = kvmask_ref[...]
    q_rows = jnp.concatenate([q] * h, axis=0)               # (h*mq, d)
    k_rows = jnp.concatenate([k] * h, axis=0) * kv_mask     # (h*mk, d)
    v_rows = jnp.concatenate([v] * h, axis=0) * kv_mask     # (h*mk, d)

    s = mm_t(q_rows, k_rows) + sbias_ref[...]                # (h*mq, h*mk)

    # numerically stable fp32 softmax over keys; exp(-1e30 - max) == 0 in fp32, so masked
    # (cross-head / cross-batch) columns contribute exactly nothing.
    s = s - jnp.max(s, axis=-1, keepdims=True)
    p = jnp.exp(s)
    p = p * pl.reciprocal(jnp.sum(p, axis=-1, keepdims=True), approx=approx_recip)

    o_rows = jnp.dot(p.astype(compute_dtype), v_rows.astype(compute_dtype),
                     preferred_element_type=jnp.float32)     # (h*mq, d)

    # Row block hh holds head hh's output on head-hh lanes and zeros elsewhere; summing the
    # H row blocks reassembles the (mq, d) slab with heads back in their channel positions.
    out = o_rows[0:mq, :]
    for hh in range(1, h):
        out = out + o_rows[hh * mq:(hh + 1) * mq, :]

    out_ref[...] = out.reshape(bb, nq, d).astype(out_ref.dtype)   # one lane-dense store/step


def multihead_attention(x_q, x_kv, params, n_heads, compute_dtype=jnp.float32,
                        approx_recip=True, num_blocks=None):
    """Pallas forward of MultiheadAttention (no compression, no dropout, no W_out).

    params follow the PyTorch nn.Linear convention: W is (d_out, d_in), y = x @ W.T + b.
    compute_dtype: dtype fed to the MXU (jnp.float32 or jnp.bfloat16; bf16 is the fast path on
    every generation -- accumulation and softmax stay fp32 either way).
    num_blocks: grid steps (None -> 1 on v5e/v6e, one per TensorCore on v7x).
    """
    B, n_q, d = x_q.shape
    Bk, n_kv, dk = x_kv.shape
    assert B == Bk and d == dk and d % n_heads == 0
    d_head = d // n_heads
    scale = 1.0 / math.sqrt(d_head)

    nb = _choose_num_blocks(B, num_blocks)
    b_blk = B // nb

    # Fold the softmax scale into W_q / b_q; fuse W_k|W_v into one (2d, d) weight.
    wq = (params["wq"] * scale).astype(compute_dtype)
    bq = (params["bq"] * scale).reshape(1, d).astype(jnp.float32)
    wkv = jnp.concatenate([params["wk"], params["wv"]], axis=0).astype(compute_dtype)
    bkv = jnp.concatenate([params["bk"], params["bv"]]).reshape(1, 2 * d).astype(jnp.float32)

    kv_mask, score_bias = _build_masks(b_blk, n_q, n_kv, d, n_heads)
    r_q = n_heads * b_blk * n_q
    r_kv = n_heads * b_blk * n_kv

    # VMEM scaling guard (v7x has 64 MiB physical / 32 MiB scoped default): the fp32 score
    # slab is r_q * r_kv * 4 bytes per step.
    assert r_q * r_kv * 4 < 16 * 1024 * 1024, "score slab too large for a single step"
    # TODO(synk): if that guard trips (large N/H), tile the KV axis with an online-softmax
    # accumulator (extra 'arbitrary' grid axis + pl.when init/finalize) instead of one slab.

    kernel = functools.partial(_mha_kernel, n_heads=n_heads, compute_dtype=compute_dtype,
                               approx_recip=approx_recip)

    elem = int(np.dtype(compute_dtype).itemsize)
    flops_per_step = 2 * (b_blk * n_q * d * d            # Q projection
                          + b_blk * n_kv * d * 2 * d     # fused K|V projection
                          + r_q * d * r_kv               # scores
                          + r_q * r_kv * d)              # P @ V
    cost = pl.CostEstimate(
        flops=int(nb * flops_per_step),
        transcendentals=int(nb * (r_q * r_kv + r_q)),     # exp + reciprocal
        bytes_accessed=int((x_q.size + x_kv.size) * 4
                           + (wq.size + wkv.size) * elem
                           + (bq.size + bkv.size + kv_mask.size + score_bias.size) * 4
                           + B * n_q * d * x_q.dtype.itemsize))

    # Weights / biases / masks are grid-invariant (constant index_map), so Pallas keeps the
    # same VMEM block across steps; single-buffering them (pl.Buffered(1)) would only save a
    # few KB at d=32, so it is left at the default.
    grid_spec = pl.GridSpec(
        grid=(nb,),
        in_specs=[
            pl.BlockSpec((b_blk, n_q, d), lambda b: (b, 0, 0)),
            pl.BlockSpec((b_blk, n_kv, d), lambda b: (b, 0, 0)),
            pl.BlockSpec((d, d), lambda b: (0, 0)),
            pl.BlockSpec((1, d), lambda b: (0, 0)),
            pl.BlockSpec((2 * d, d), lambda b: (0, 0)),
            pl.BlockSpec((1, 2 * d), lambda b: (0, 0)),
            pl.BlockSpec((r_kv, d), lambda b: (0, 0)),
            pl.BlockSpec((r_q, r_kv), lambda b: (0, 0)),
        ],
        out_specs=pl.BlockSpec((b_blk, n_q, d), lambda b: (b, 0, 0)),
    )

    return pl.pallas_call(
        kernel,
        out_shape=jax.ShapeDtypeStruct((B, n_q, d), x_q.dtype),
        grid_spec=grid_spec,
        compiler_params=pltpu.CompilerParams(dimension_semantics=("parallel",)),
        cost_estimate=cost,
    )(x_q, x_kv, wq, bq, wkv, bkv, kv_mask, score_bias)


def _xavier_uniform(key, shape, gain):
    fan_in, fan_out = shape[1], shape[0]
    bound = gain * math.sqrt(6.0 / (fan_in + fan_out))
    return jax.random.uniform(key, shape, jnp.float32, -bound, bound)


def _reference(x_q, x_kv, params, n_heads):
    # pure-JAX mirror of the PyTorch forward (no compression, no dropout, no W_out)
    def lin(x, w, b):
        return x @ w.T + b

    q = lin(x_q, params["wq"], params["bq"])
    k = lin(x_kv, params["wk"], params["bk"])
    v = lin(x_kv, params["wv"], params["bv"])

    def resh(t):
        b, n, dd = t.shape
        dh = dd // n_heads
        return t.reshape(b, n, n_heads, dh).transpose(0, 2, 1, 3).reshape(b * n_heads, n, dh)

    B, n_q, d = q.shape
    dh = d // n_heads
    qh, kh, vh = resh(q), resh(k), resh(v)
    att = jax.nn.softmax(qh @ kh.transpose(0, 2, 1) / math.sqrt(dh), axis=-1)
    x = att @ vh
    return x.reshape(B, n_heads, n_q, dh).transpose(0, 2, 1, 3).reshape(B, n_q, d)


if __name__ == "__main__":
    B, N, d, n_heads = 2, 8, 32, 4
    # dropout = 0.0  => self.dropout is None in the reference module.
    # TODO(synk): dropout>0 training path (random attention-matrix dropout) not implemented.

    key = jax.random.PRNGKey(0)
    kq, kk, kv, kxq, kxkv = jax.random.split(key, 5)
    gain = 1.0 / math.sqrt(2.0)   # xavier init, n_heads > 1 => all of W_q, W_k, W_v
    params = {
        "wq": _xavier_uniform(kq, (d, d), gain), "bq": jnp.zeros((d,), jnp.float32),
        "wk": _xavier_uniform(kk, (d, d), gain), "bk": jnp.zeros((d,), jnp.float32),
        "wv": _xavier_uniform(kv, (d, d), gain), "bv": jnp.zeros((d,), jnp.float32),
    }

    x_q = jax.random.normal(kxq, (B, N, d), jnp.float32)
    x_kv = jax.random.normal(kxkv, (B, N, d), jnp.float32)

    ref = _reference(x_q, x_kv, params, n_heads)

    # default path: batch folded per the device heuristic, fp32 MXU, approx EUP reciprocal
    out = jax.block_until_ready(multihead_attention(x_q, x_kv, params, n_heads))
    assert out.shape == (B, N, d)
    assert jnp.allclose(out, ref, atol=2e-3, rtol=2e-3), "fp32(approx) kernel mismatch"

    # exact-reciprocal fp32 path: tight correctness check of the math
    out_exact = jax.block_until_ready(
        multihead_attention(x_q, x_kv, params, n_heads, approx_recip=False))
    assert jnp.allclose(out_exact, ref, atol=1e-4, rtol=1e-4), "fp32(exact) kernel mismatch"

    # v7x-style split: 2 grid steps, (B//2, N, d) block per step
    out_split = jax.block_until_ready(
        multihead_attention(x_q, x_kv, params, n_heads, num_blocks=2))
    assert jnp.allclose(out_split, ref, atol=2e-3, rtol=2e-3), "2-step kernel mismatch"

    # bf16-on-MXU fast path (bf16 operands, fp32 accumulate, fp32 softmax)
    out_bf16 = jax.block_until_ready(
        multihead_attention(x_q, x_kv, params, n_heads, compute_dtype=jnp.bfloat16))
    assert jnp.allclose(out_bf16, ref, atol=5e-2, rtol=5e-2), "bf16 kernel mismatch"

    print("KERNEL_OK")
</pallas_src>

<mosaic_0001>
module attributes {stable_mosaic.version = 11 : i64} {
  func.func @_mha_kernel(%arg0: i32, %arg1: memref<2x8x32xf32, #tpu.memory_space<vmem>>, %arg2: memref<2x8x32xf32, #tpu.memory_space<vmem>>, %arg3: memref<32x32xf32, #tpu.memory_space<vmem>>, %arg4: memref<1x32xf32, #tpu.memory_space<vmem>>, %arg5: memref<64x32xf32, #tpu.memory_space<vmem>>, %arg6: memref<1x64xf32, #tpu.memory_space<vmem>>, %arg7: memref<64x32xf32, #tpu.memory_space<vmem>>, %arg8: memref<64x64xf32, #tpu.memory_space<vmem>>, %arg9: memref<2x8x32xf32, #tpu.memory_space<vmem>>) attributes {dimension_semantics = [#tpu.dimension_semantics<parallel>], iteration_bounds = array<i64: 1>, scalar_prefetch = 0 : i64, scratch_operands = 0 : i64, tpu.core_type = #tpu.core_type<tc>, window_params = [{transform_indices = @transform_0, window_bounds = array<i64: 2, 8, 32>}, {transform_indices = @transform_1, window_bounds = array<i64: 2, 8, 32>}, {pipeline_mode = #tpu.pipeline_mode<synchronous>, transform_indices = @transform_2, window_bounds = array<i64: 32, 32>}, {pipeline_mode = #tpu.pipeline_mode<synchronous>, transform_indices = @transform_3, window_bounds = array<i64: 1, 32>}, {pipeline_mode = #tpu.pipeline_mode<synchronous>, transform_indices = @transform_4, window_bounds = array<i64: 64, 32>}, {pipeline_mode = #tpu.pipeline_mode<synchronous>, transform_indices = @transform_5, window_bounds = array<i64: 1, 64>}, {pipeline_mode = #tpu.pipeline_mode<synchronous>, transform_indices = @transform_6, window_bounds = array<i64: 64, 32>}, {pipeline_mode = #tpu.pipeline_mode<synchronous>, transform_indices = @transform_7, window_bounds = array<i64: 64, 64>}, {transform_indices = @transform_8, window_bounds = array<i64: 2, 8, 32>}]} {
    %c0 = arith.constant 0 : index
    %c0_0 = arith.constant 0 : index
    %c0_1 = arith.constant 0 : index
    %0 = vector.load %arg1[%c0, %c0_0, %c0_1] : memref<2x8x32xf32, #tpu.memory_space<vmem>>, vector<2x8x32xf32>
    %1 = vector.shape_cast %0 : vector<2x8x32xf32> to vector<16x32xf32>
    %c0_2 = arith.constant 0 : index
    %c0_3 = arith.constant 0 : index
    %c0_4 = arith.constant 0 : index
    %2 = vector.load %arg2[%c0_2, %c0_3, %c0_4] : memref<2x8x32xf32, #tpu.memory_space<vmem>>, vector<2x8x32xf32>
    %3 = vector.shape_cast %2 : vector<2x8x32xf32> to vector<16x32xf32>
    %c0_5 = arith.constant 0 : index
    %c0_6 = arith.constant 0 : index
    %4 = vector.load %arg3[%c0_5, %c0_6] : memref<32x32xf32, #tpu.memory_space<vmem>>, vector<32x32xf32>
    %cst = arith.constant dense<0.000000e+00> : vector<16x32xf32>
    %5 = tpu.matmul %1, %4, %cst {dimension_numbers = #tpu.dot_dimension_numbers<[1], [1], [0], [0], [0, 0, 1, 0], [], []>} : vector<16x32xf32>, vector<32x32xf32>, vector<16x32xf32> -> vector<16x32xf32>
    %c0_7 = arith.constant 0 : index
    %c0_8 = arith.constant 0 : index
    %6 = vector.load %arg4[%c0_7, %c0_8] : memref<1x32xf32, #tpu.memory_space<vmem>>, vector<1x32xf32>
    %7 = vector.broadcast %6 : vector<1x32xf32> to vector<16x32xf32>
    %8 = arith.addf %5, %7 : vector<16x32xf32>
    %c0_9 = arith.constant 0 : index
    %c0_10 = arith.constant 0 : index
    %9 = vector.load %arg5[%c0_9, %c0_10] : memref<64x32xf32, #tpu.memory_space<vmem>>, vector<64x32xf32>
    %cst_11 = arith.constant dense<0.000000e+00> : vector<16x64xf32>
    %10 = tpu.matmul %3, %9, %cst_11 {dimension_numbers = #tpu.dot_dimension_numbers<[1], [1], [0], [0], [0, 0, 1, 0], [], []>} : vector<16x32xf32>, vector<64x32xf32>, vector<16x64xf32> -> vector<16x64xf32>
    %c0_12 = arith.constant 0 : index
    %c0_13 = arith.constant 0 : index
    %11 = vector.load %arg6[%c0_12, %c0_13] : memref<1x64xf32, #tpu.memory_space<vmem>>, vector<1x64xf32>
    %12 = vector.broadcast %11 : vector<1x64xf32> to vector<16x64xf32>
    %13 = arith.addf %10, %12 : vector<16x64xf32>
    %14 = vector.extract_strided_slice %13 {offsets = [0, 0], sizes = [16, 32], strides = [1, 1]} : vector<16x64xf32> to vector<16x32xf32>
    %15 = vector.extract_strided_slice %13 {offsets = [0, 32], sizes = [16, 32], strides = [1, 1]} : vector<16x64xf32> to vector<16x32xf32>
    %c0_14 = arith.constant 0 : index
    %c0_15 = arith.constant 0 : index
    %16 = vector.load %arg7[%c0_14, %c0_15] : memref<64x32xf32, #tpu.memory_space<vmem>>, vector<64x32xf32>
    %17 = tpu.concatenate %8, %8, %8, %8 in 0 : vector<16x32xf32>, vector<16x32xf32>, vector<16x32xf32>, vector<16x32xf32> -> vector<64x32xf32>
    %18 = tpu.concatenate %14, %14, %14, %14 in 0 : vector<16x32xf32>, vector<16x32xf32>, vector<16x32xf32>, vector<16x32xf32> -> vector<64x32xf32>
    %19 = arith.mulf %18, %16 : vector<64x32xf32>
    %20 = tpu.concatenate %15, %15, %15, %15 in 0 : vector<16x32xf32>, vector<16x32xf32>, vector<16x32xf32>, vector<16x32xf32> -> vector<64x32xf32>
    %21 = arith.mulf %20, %16 : vector<64x32xf32>
    %cst_16 = arith.constant dense<0.000000e+00> : vector<64x64xf32>
    %22 = tpu.matmul %17, %19, %cst_16 {dimension_numbers = #tpu.dot_dimension_numbers<[1], [1], [0], [0], [0, 0, 1, 0], [], []>} : vector<64x32xf32>, vector<64x32xf32>, vector<64x64xf32> -> vector<64x64xf32>
    %c0_17 = arith.constant 0 : index
    %c0_18 = arith.constant 0 : index
    %23 = vector.load %arg8[%c0_17, %c0_18] : memref<64x64xf32, #tpu.memory_space<vmem>>, vector<64x64xf32>
    %24 = arith.addf %22, %23 : vector<64x64xf32>
    %cst_19 = arith.constant dense<0xFF800000> : vector<64xf32>
    %25 = vector.multi_reduction <maximumf>, %24, %cst_19 [1] : vector<64x64xf32> to vector<64xf32>
    %26 = vector.shape_cast %25 : vector<64xf32> to vector<64x1xf32>
    %27 = vector.broadcast %26 : vector<64x1xf32> to vector<64x64xf32>
    %28 = arith.subf %24, %27 : vector<64x64xf32>
    %29 = math.exp %28 : vector<64x64xf32>
    %cst_20 = arith.constant dense<0.000000e+00> : vector<64xf32>
    %30 = vector.multi_reduction <add>, %29, %cst_20 [1] : vector<64x64xf32> to vector<64xf32>
    %31 = vector.shape_cast %30 : vector<64xf32> to vector<64x1xf32>
    %32 = tpu.reciprocal %31 {approx = true} : vector<64x1xf32> -> vector<64x1xf32>
    %33 = vector.broadcast %32 : vector<64x1xf32> to vector<64x64xf32>
    %34 = arith.mulf %29, %33 : vector<64x64xf32>
    %cst_21 = arith.constant dense<0.000000e+00> : vector<64x32xf32>
    %35 = tpu.matmul %34, %21, %cst_21 {dimension_numbers = #tpu.dot_dimension_numbers<[1], [0], [0], [1], [0, 0, 1, 1], [], []>} : vector<64x64xf32>, vector<64x32xf32>, vector<64x32xf32> -> vector<64x32xf32>
    %36 = vector.extract_strided_slice %35 {offsets = [0, 0], sizes = [16, 32], strides = [1, 1]} : vector<64x32xf32> to vector<16x32xf32>
    %37 = vector.extract_strided_slice %35 {offsets = [16, 0], sizes = [16, 32], strides = [1, 1]} : vector<64x32xf32> to vector<16x32xf32>
    %38 = arith.addf %36, %37 : vector<16x32xf32>
    %39 = vector.extract_strided_slice %35 {offsets = [32, 0], sizes = [16, 32], strides = [1, 1]} : vector<64x32xf32> to vector<16x32xf32>
    %40 = arith.addf %38, %39 : vector<16x32xf32>
    %41 = vector.extract_strided_slice %35 {offsets = [48, 0], sizes = [16, 32], strides = [1, 1]} : vector<64x32xf32> to vector<16x32xf32>
    %42 = arith.addf %40, %41 : vector<16x32xf32>
    %43 = vector.shape_cast %42 : vector<16x32xf32> to vector<2x8x32xf32>
    %c0_22 = arith.constant 0 : index
    %c0_23 = arith.constant 0 : index
    %c0_24 = arith.constant 0 : index
    %44 = vector.load %arg9[%c0_22, %c0_23, %c0_24] : memref<2x8x32xf32, #tpu.memory_space<vmem>>, vector<2x8x32xf32>
    tpu.vector_store %arg9[%c0_22, %c0_23, %c0_24], %43 {strides = array<i32>} : memref<2x8x32xf32, #tpu.memory_space<vmem>>, vector<2x8x32xf32>,
    return
  }
  func.func @transform_0(%arg0: i32) -> (i32, i32, i32) {
    %c0_i32 = arith.constant 0 : i32
    %c0_i32_0 = arith.constant 0 : i32
    %c0_i32_1 = arith.constant 0 : i32
    return %arg0, %c0_i32, %c0_i32_0 : i32, i32, i32
  }
  func.func @transform_1(%arg0: i32) -> (i32, i32, i32) {
    %c0_i32 = arith.constant 0 : i32
    %c0_i32_0 = arith.constant 0 : i32
    %c0_i32_1 = arith.constant 0 : i32
    return %arg0, %c0_i32, %c0_i32_0 : i32, i32, i32
  }
  func.func @transform_2(%arg0: i32) -> (i32, i32) {
    %c0_i32 = arith.constant 0 : i32
    %c0_i32_0 = arith.constant 0 : i32
    %c0_i32_1 = arith.constant 0 : i32
    return %c0_i32, %c0_i32_0 : i32, i32
  }
  func.func @transform_3(%arg0: i32) -> (i32, i32) {
    %c0_i32 = arith.constant 0 : i32
    %c0_i32_0 = arith.constant 0 : i32
    %c0_i32_1 = arith.constant 0 : i32
    return %c0_i32, %c0_i32_0 : i32, i32
  }
  func.func @transform_4(%arg0: i32) -> (i32, i32) {
    %c0_i32 = arith.constant 0 : i32
    %c0_i32_0 = arith.constant 0 : i32
    %c0_i32_1 = arith.constant 0 : i32
    return %c0_i32, %c0_i32_0 : i32, i32
  }
  func.func @transform_5(%arg0: i32) -> (i32, i32) {
    %c0_i32 = arith.constant 0 : i32
    %c0_i32_0 = arith.constant 0 : i32
    %c0_i32_1 = arith.constant 0 : i32
    return %c0_i32, %c0_i32_0 : i32, i32
  }
  func.func @transform_6(%arg0: i32) -> (i32, i32) {
    %c0_i32 = arith.constant 0 : i32
    %c0_i32_0 = arith.constant 0 : i32
    %c0_i32_1 = arith.constant 0 : i32
    return %c0_i32, %c0_i32_0 : i32, i32
  }
  func.func @transform_7(%arg0: i32) -> (i32, i32) {
    %c0_i32 = arith.constant 0 : i32
    %c0_i32_0 = arith.constant 0 : i32
    %c0_i32_1 = arith.constant 0 : i32
    return %c0_i32, %c0_i32_0 : i32, i32
  }
  func.func @transform_8(%arg0: i32) -> (i32, i32, i32) {
    %c0_i32 = arith.constant 0 : i32
    %c0_i32_0 = arith.constant 0 : i32
    %c0_i32_1 = arith.constant 0 : i32
    return %arg0, %c0_i32, %c0_i32_0 : i32, i32, i32
  }
}

</mosaic_0001>

<llo_original>
// kernel: tpu_custom_call.1
$region0: #{tpu_custom_call.1}
  #allocation0 [shape = 'u32[]', space=smem, size = 0x4, offset = 0x4, fixed_abs, tag = 'smem constant byte address 0x4 - core index']
  #allocation1 [shape = 'u32[144,128]{1,0:T(1,128)}', space=vmem, size = 0x12000, scoped, tag = 'internal scratch']
  %s0 = inlined_call_operand.vmem [shape: f32[2,8,32], index: 0, kind: input, shape index: {}]
  %s1 = inlined_call_operand.vmem [shape: f32[2,8,32], index: 1, kind: input, shape index: {}]
  %s2 = inlined_call_operand.vmem [shape: f32[32,32], index: 2, kind: input, shape index: {}]
  %s3 = inlined_call_operand.vmem [shape: f32[1,32], index: 3, kind: input, shape index: {}]
  %s4 = inlined_call_operand.vmem [shape: f32[64,32], index: 4, kind: input, shape index: {}]
  %s5 = inlined_call_operand.vmem [shape: f32[1,64], index: 5, kind: input, shape index: {}]
  %s6 = inlined_call_operand.vmem [shape: f32[64,32], index: 6, kind: input, shape index: {}]
  %s7 = inlined_call_operand.vmem [shape: f32[64,64], index: 7, kind: input, shape index: {}]
  %s8 = inlined_call_operand.hbm [shape: f32[2,8,32], index: 8, kind: output, shape index: {}]
  %s9 = sld [smem:[#allocation0]]
  $region42: #{tpu_custom_call.1} parent=0
    _
  %s11 = ssub.s32 1, %s9
  %s12 = scalar_select 0, %s11, %s9
  $region1: #{tpu_custom_call.1} parent=0
    #allocation2 [shape = 'u8[8192]{0}', space=vmem, size = 0x2000, scoped, tag = 'output window, operand 0, single buffered']
    #allocation3 [shape = 's32[1]{0}', space=sflag, size = 0x4, scoped, tag = 'scoped memory for tpu_custom_call.1']
    %13 = vsyncpa [#allocation3], 0
    // Predicated region
    $region2: #{tpu_custom_call.1} parent=1 // pred_check
      _
    $region3: #{tpu_custom_call.1} parent=1 // pred_check_branch
      %15 = sbr.rel (0) target = $region5
    $region4: #{tpu_custom_call.1} parent=1 // pred_region
      _
    $region5: #{tpu_custom_call.1} parent=1 // pred_fallthru
      _
    // Predicated region
    $region6: #{tpu_custom_call.1} parent=1 // pred_check
      _
    $region7: #{tpu_custom_call.1} parent=1 // pred_check_branch
      %17 = sbr.rel (0) target = $region9
    $region8: #{tpu_custom_call.1} parent=1 // pred_region
      _
    $region9: #{tpu_custom_call.1} parent=1 // pred_fallthru
      _
    // Predicated region
    $region10: #{tpu_custom_call.1} parent=1 // pred_check
      _
    $region11: #{tpu_custom_call.1} parent=1 // pred_check_branch
      %19 = sbr.rel (0) target = $region13
    $region12: #{tpu_custom_call.1} parent=1 // pred_region
      _
    $region13: #{tpu_custom_call.1} parent=1 // pred_fallthru
      _
    // Predicated region
    $region14: #{tpu_custom_call.1} parent=1 // pred_check
      _
    $region15: #{tpu_custom_call.1} parent=1 // pred_check_branch
      %21 = sbr.rel (0) target = $region17
    $region16: #{tpu_custom_call.1} parent=1 // pred_region
      _
    $region17: #{tpu_custom_call.1} parent=1 // pred_fallthru
      _
    // Predicated region
    $region18: #{tpu_custom_call.1} parent=1 // pred_check
      _
    $region19: #{tpu_custom_call.1} parent=1 // pred_check_branch
      %23 = sbr.rel (0) target = $region21
    $region20: #{tpu_custom_call.1} parent=1 // pred_region
      _
    $region21: #{tpu_custom_call.1} parent=1 // pred_fallthru
      _
    // Predicated region
    $region22: #{tpu_custom_call.1} parent=1 // pred_check
      _
    $region23: #{tpu_custom_call.1} parent=1 // pred_check_branch
      %25 = sbr.rel (0) target = $region25
    $region24: #{tpu_custom_call.1} parent=1 // pred_region
      _
    $region25: #{tpu_custom_call.1} parent=1 // pred_fallthru
      _
    // Predicated region
    $region26: #{tpu_custom_call.1} parent=1 // pred_check
      _
    $region27: #{tpu_custom_call.1} parent=1 // pred_check_branch
      %27 = sbr.rel (0) target = $region29
    $region28: #{tpu_custom_call.1} parent=1 // pred_region
      _
    $region29: #{tpu_custom_call.1} parent=1 // pred_fallthru
      _
    // Predicated region
    $region30: #{tpu_custom_call.1} parent=1 // pred_check
      _
    $region31: #{tpu_custom_call.1} parent=1 // pred_check_branch
      %29 = sbr.rel (0) target = $region33
    $region32: #{tpu_custom_call.1} parent=1 // pred_region
      _
    $region33: #{tpu_custom_call.1} parent=1 // pred_fallthru
      _
    %v30 = vld [vmem:[%s0] sm:$0xff]
    %v31 = vld [vmem:[%s0 + $0x8] sm:$0xff]
    %v32 = vld [vmem:[%s1] sm:$0xff]
    %v33 = vld [vmem:[%s1 + $0x8] sm:$0xff]
    %v34 = vld [vmem:[%s2] sm:$0xff]
    %v35 = vld [vmem:[%s2 + $0x8] sm:$0xff]
    %v36 = vld [vmem:[%s2 + $0x10] sm:$0xff]
    %v37 = vld [vmem:[%s2 + $0x18] sm:$0xff]
    %v38 = vld [vmem:[%s3] sm:$0x1]
    %v40 = vlaneseq
    %v41 = vshrl.u32 %v40, 7
    %v42 = vsub.s32 0, %v41
    %v43 = vrot.slane %v38, %v42
    %vm45 = vcmask 261120
    %v47 = vsel %vm45, %v30, 0
    %v50 = vsel %vm45, %v31, 0
    %v53 = vsel %vm45, %v34, 0
    %v56 = vsel %vm45, %v35, 0
    %v59 = vsel %vm45, %v36, 0
    %v62 = vsel %vm45, %v37, 0
    %64 = vmatprep.subr.mxu0 0.0
    %65 = vmatpush1.xpose.msra.mxu0 0.0
    %66 = vmatprep.subr.mxu0 0.0
    %67 = vmatpush1.xpose.msra.mxu0 0.0
    %68 = vmatprep.subr.mxu0 0.0
    %69 = vmatpush1.xpose.msra.mxu0 0.0
    %70 = vmatprep.subr.mxu0 0.0
    %71 = vmatpush1.xpose.msra.mxu0 0.0
    %72 = vmatprep.subr.mxu0 0.0
    %73 = vmatpush1.xpose.msra.mxu0 0.0
    %74 = vmatprep.subr.mxu0 0.0
    %75 = vmatpush1.xpose.msra.mxu0 0.0
    %76 = vmatprep.subr.mxu0 0.0
    %77 = vmatpush1.xpose.msra.mxu0 0.0
    %78 = vmatprep.subr.mxu0 0.0
    %79 = vmatpush1.xpose.msra.mxu0 0.0
    %80 = vmatprep.subr.mxu0 0.0
    %81 = vmatpush1.xpose.msra.mxu0 0.0
    %82 = vmatprep.subr.mxu0 0.0
    %83 = vmatpush1.xpose.msra.mxu0 0.0
    %84 = vmatprep.subr.mxu0 0.0
    %85 = vmatpush1.xpose.msra.mxu0 0.0
    %86 = vmatprep.subr.mxu0 0.0
    %87 = vmatpush1.xpose.msra.mxu0 0.0
    %88 = vmatprep.subr.mxu0 0.0
    %89 = vmatpush1.xpose.msra.mxu0 %v62
    %90 = vmatprep.subr.mxu0 0.0
    %91 = vmatpush1.xpose.msra.mxu0 %v59
    %92 = vmatprep.subr.mxu0 0.0
    %93 = vmatpush1.xpose.msra.mxu0 %v56
    %94 = vmatprep.subr.mxu0 0.0
    %95 = vmatpush1.xpose.msra.mxu0 %v53
    %96 = vmatprep.subr.mxu0 0.0
    %97 = vmatpush2.xpose.msra.mxu0 0.0
    %98 = vmatprep.subr.mxu0 0.0
    %99 = vmatpush2.xpose.msra.mxu0 0.0
    %100 = vmatprep.subr.mxu0 0.0
    %101 = vmatpush2.xpose.msra.mxu0 0.0
    %102 = vmatprep.subr.mxu0 0.0
    %103 = vmatpush2.xpose.msra.mxu0 0.0
    %104 = vmatprep.subr.mxu0 0.0
    %105 = vmatpush2.xpose.msra.mxu0 0.0
    %106 = vmatprep.subr.mxu0 0.0
    %107 = vmatpush2.xpose.msra.mxu0 0.0
    %108 = vmatprep.subr.mxu0 0.0
    %109 = vmatpush2.xpose.msra.mxu0 0.0
    %110 = vmatprep.subr.mxu0 0.0
    %111 = vmatpush2.xpose.msra.mxu0 0.0
    %112 = vmatprep.subr.mxu0 0.0
    %113 = vmatpush2.xpose.msra.mxu0 0.0
    %114 = vmatprep.subr.mxu0 0.0
    %115 = vmatpush2.xpose.msra.mxu0 0.0
    %116 = vmatprep.subr.mxu0 0.0
    %117 = vmatpush2.xpose.msra.mxu0 0.0
    %118 = vmatprep.subr.mxu0 0.0
    %119 = vmatpush2.xpose.msra.mxu0 0.0
    %120 = vmatprep.subr.mxu0 0.0
    %121 = vmatpush2.xpose.msra.mxu0 0.0
    %122 = vmatprep.subr.mxu0 0.0
    %123 = vmatpush2.xpose.msra.mxu0 0.0
    %124 = vmatprep.subr.mxu0 0.0
    %125 = vmatpush2.xpose.msra.mxu0 0.0
    %126 = vmatprep.subr.mxu0 0.0
    %127 = vmatpush2.xpose.msra.mxu0 0.0
    %128 = vmatprep.mubr.f32.mxu0 0.0
    %129 = vmatmul.mubr.f32.gmra.mxu0 %v47
    %v130 = vpop.f32.mrf.mxu0
    %v131 = vadd.f32 %v43, %v130
    %v132 = vpop.f32.mrf.mxu0
    %133 = vmatprep.mubr.f32.mxu0 0.0
    %134 = vmatmul.mubr.f32.gmra.mxu0 %v50
    %v135 = vpop.f32.mrf.mxu0
    %v136 = vadd.f32 %v43, %v135
    %v137 = vpop.f32.mrf.mxu0
    %138 = vdwg.mxu0
    %v139 = vld [vmem:[%s4] sm:$0xff]
    %v140 = vld [vmem:[%s4 + $0x8] sm:$0xff]
    %v141 = vld [vmem:[%s4 + $0x10] sm:$0xff]
    %v142 = vld [vmem:[%s4 + $0x18] sm:$0xff]
    %v143 = vld [vmem:[%s4 + $0x20] sm:$0xff]
    %v144 = vld [vmem:[%s4 + $0x28] sm:$0xff]
    %v145 = vld [vmem:[%s4 + $0x30] sm:$0xff]
    %v146 = vld [vmem:[%s4 + $0x38] sm:$0xff]
    %v147 = vld [vmem:[%s5] sm:$0x1]
    %v149 = vlaneseq
    %v150 = vshrl.u32 %v149, 7
    %v151 = vsub.s32 0, %v150
    %v152 = vrot.slane %v147, %v151
    %v155 = vsel %vm45, %v32, 0
    %v158 = vsel %vm45, %v33, 0
    %v161 = vsel %vm45, %v139, 0
    %v164 = vsel %vm45, %v140, 0
    %v167 = vsel %vm45, %v141, 0
    %v170 = vsel %vm45, %v142, 0
    %v173 = vsel %vm45, %v143, 0
    %v176 = vsel %vm45, %v144, 0
    %v179 = vsel %vm45, %v145, 0
    %v182 = vsel %vm45, %v146, 0
    %184 = vmatprep.subr.mxu0 0.0
    %185 = vmatpush1.xpose.msra.mxu0 0.0
    %186 = vmatprep.subr.mxu0 0.0
    %187 = vmatpush1.xpose.msra.mxu0 0.0
    %188 = vmatprep.subr.mxu0 0.0
    %189 = vmatpush1.xpose.msra.mxu0 0.0
    %190 = vmatprep.subr.mxu0 0.0
    %191 = vmatpush1.xpose.msra.mxu0 0.0
    %192 = vmatprep.subr.mxu0 0.0
    %193 = vmatpush1.xpose.msra.mxu0 0.0
    %194 = vmatprep.subr.mxu0 0.0
    %195 = vmatpush1.xpose.msra.mxu0 0.0
    %196 = vmatprep.subr.mxu0 0.0
    %197 = vmatpush1.xpose.msra.mxu0 0.0
    %198 = vmatprep.subr.mxu0 0.0
    %199 = vmatpush1.xpose.msra.mxu0 0.0
    %200 = vmatprep.subr.mxu0 0.0
    %201 = vmatpush1.xpose.msra.mxu0 %v182
    %202 = vmatprep.subr.mxu0 0.0
    %203 = vmatpush1.xpose.msra.mxu0 %v179
    %204 = vmatprep.subr.mxu0 0.0
    %205 = vmatpush1.xpose.msra.mxu0 %v176
    %206 = vmatprep.subr.mxu0 0.0
    %207 = vmatpush1.xpose.msra.mxu0 %v173
    %208 = vmatprep.subr.mxu0 0.0
    %209 = vmatpush1.xpose.msra.mxu0 %v170
    %210 = vmatprep.subr.mxu0 0.0
    %211 = vmatpush1.xpose.msra.mxu0 %v167
    %212 = vmatprep.subr.mxu0 0.0
    %213 = vmatpush1.xpose.msra.mxu0 %v164
    %214 = vmatprep.subr.mxu0 0.0
    %215 = vmatpush1.xpose.msra.mxu0 %v161
    %216 = vmatprep.subr.mxu0 0.0
    %217 = vmatpush2.xpose.msra.mxu0 0.0
    %218 = vmatprep.subr.mxu0 0.0
    %219 = vmatpush2.xpose.msra.mxu0 0.0
    %220 = vmatprep.subr.mxu0 0.0
    %221 = vmatpush2.xpose.msra.mxu0 0.0
    %222 = vmatprep.subr.mxu0 0.0
    %223 = vmatpush2.xpose.msra.mxu0 0.0
    %224 = vmatprep.subr.mxu0 0.0
    %225 = vmatpush2.xpose.msra.mxu0 0.0
    %226 = vmatprep.subr.mxu0 0.0
    %227 = vmatpush2.xpose.msra.mxu0 0.0
    %228 = vmatprep.subr.mxu0 0.0
    %229 = vmatpush2.xpose.msra.mxu0 0.0
    %230 = vmatprep.subr.mxu0 0.0
    %231 = vmatpush2.xpose.msra.mxu0 0.0
    %232 = vmatprep.subr.mxu0 0.0
    %233 = vmatpush2.xpose.msra.mxu0 0.0
    %234 = vmatprep.subr.mxu0 0.0
    %235 = vmatpush2.xpose.msra.mxu0 0.0
    %236 = vmatprep.subr.mxu0 0.0
    %237 = vmatpush2.xpose.msra.mxu0 0.0
    %238 = vmatprep.subr.mxu0 0.0
    %239 = vmatpush2.xpose.msra.mxu0 0.0
    %240 = vmatprep.subr.mxu0 0.0
    %241 = vmatpush2.xpose.msra.mxu0 0.0
    %242 = vmatprep.subr.mxu0 0.0
    %243 = vmatpush2.xpose.msra.mxu0 0.0
    %244 = vmatprep.subr.mxu0 0.0
    %245 = vmatpush2.xpose.msra.mxu0 0.0
    %246 = vmatprep.subr.mxu0 0.0
    %247 = vmatpush2.xpose.msra.mxu0 0.0
    %248 = vmatprep.mubr.f32.mxu0 0.0
    %249 = vmatmul.mubr.f32.gmra.mxu0 %v155
    %v250 = vpop.f32.mrf.mxu0
    %v251 = vadd.f32 %v152, %v250
    %v252 = vpop.f32.mrf.mxu0
    %253 = vmatprep.mubr.f32.mxu0 0.0
    %254 = vmatmul.mubr.f32.gmra.mxu0 %v158
    %v255 = vpop.f32.mrf.mxu0
    %v256 = vadd.f32 %v152, %v255
    %v257 = vpop.f32.mrf.mxu0
    %258 = vdwg.mxu0
    %v259 = vld [vmem:[%s6] sm:$0xff]
    %v260 = vld [vmem:[%s6 + $0x8] sm:$0xff]
    %v261 = vld [vmem:[%s6 + $0x10] sm:$0xff]
    %v262 = vld [vmem:[%s6 + $0x18] sm:$0xff]
    %v263 = vld [vmem:[%s6 + $0x20] sm:$0xff]
    %v264 = vld [vmem:[%s6 + $0x28] sm:$0xff]
    %v265 = vld [vmem:[%s6 + $0x30] sm:$0xff]
    %v266 = vld [vmem:[%s6 + $0x38] sm:$0xff]
    %v267 = vmul.f32 %v251, %v259
    %v268 = vmul.f32 %v256, %v260
    %v269 = vmul.f32 %v251, %v261
    %v270 = vmul.f32 %v256, %v262
    %v271 = vmul.f32 %v251, %v263
    %v272 = vmul.f32 %v256, %v264
    %v273 = vmul.f32 %v251, %v265
    %v274 = vmul.f32 %v256, %v266
    %283 = vrot.lane.b32.xlu0 %v259, 32
    %v284 = vpop.permute.xlu0 %283
    %285 = vrot.lane.b32.xlu0 %v260, 32
    %v286 = vpop.permute.xlu0 %285
    %287 = vrot.lane.b32.xlu0 %v261, 32
    %v288 = vpop.permute.xlu0 %287
    %289 = vrot.lane.b32.xlu0 %v262, 32
    %v290 = vpop.permute.xlu0 %289
    %291 = vrot.lane.b32.xlu0 %v263, 32
    %v292 = vpop.permute.xlu0 %291
    %293 = vrot.lane.b32.xlu0 %v264, 32
    %v294 = vpop.permute.xlu0 %293
    %295 = vrot.lane.b32.xlu0 %v265, 32
    %v296 = vpop.permute.xlu0 %295
    %297 = vrot.lane.b32.xlu0 %v266, 32
    %v298 = vpop.permute.xlu0 %297
    %v307 = vmul.f32 %v251, %v284
    %v308 = vmul.f32 %v256, %v286
    %v309 = vmul.f32 %v251, %v288
    %v310 = vmul.f32 %v256, %v290
    %v311 = vmul.f32 %v251, %v292
    %v312 = vmul.f32 %v256, %v294
    %v313 = vmul.f32 %v251, %v296
    %v314 = vmul.f32 %v256, %v298
    %v315 = vld [vmem:[%s7] sm:$0xff]
    %v316 = vld [vmem:[%s7 + $0x8] sm:$0xff]
    %v317 = vld [vmem:[%s7 + $0x10] sm:$0xff]
    %v318 = vld [vmem:[%s7 + $0x18] sm:$0xff]
    %v319 = vld [vmem:[%s7 + $0x20] sm:$0xff]
    %v320 = vld [vmem:[%s7 + $0x28] sm:$0xff]
    %v321 = vld [vmem:[%s7 + $0x30] sm:$0xff]
    %v322 = vld [vmem:[%s7 + $0x38] sm:$0xff]
    %v324 = vsel %vm45, %v131, 0
    %v327 = vsel %vm45, %v136, 0
    %v330 = vsel %vm45, %v267, 0
    %v333 = vsel %vm45, %v268, 0
    %v336 = vsel %vm45, %v269, 0
    %v339 = vsel %vm45, %v270, 0
    %v342 = vsel %vm45, %v271, 0
    %v345 = vsel %vm45, %v272, 0
    %v348 = vsel %vm45, %v273, 0
    %v351 = vsel %vm45, %v274, 0
    %353 = vmatprep.subr.mxu0 0.0
    %354 = vmatpush1.xpose.msra.mxu0 0.0
    %355 = vmatprep.subr.mxu0 0.0
    %356 = vmatpush1.xpose.msra.mxu0 0.0
    %357 = vmatprep.subr.mxu0 0.0
    %358 = vmatpush1.xpose.msra.mxu0 0.0
    %359 = vmatprep.subr.mxu0 0.0
    %360 = vmatpush1.xpose.msra.mxu0 0.0
    %361 = vmatprep.subr.mxu0 0.0
    %362 = vmatpush1.xpose.msra.mxu0 0.0
    %363 = vmatprep.subr.mxu0 0.0
    %364 = vmatpush1.xpose.msra.mxu0 0.0
    %365 = vmatprep.subr.mxu0 0.0
    %366 = vmatpush1.xpose.msra.mxu0 0.0
    %367 = vmatprep.subr.mxu0 0.0
    %368 = vmatpush1.xpose.msra.mxu0 0.0
    %369 = vmatprep.subr.mxu0 0.0
    %370 = vmatpush1.xpose.msra.mxu0 %v351
    %371 = vmatprep.subr.mxu0 0.0
    %372 = vmatpush1.xpose.msra.mxu0 %v348
    %373 = vmatprep.subr.mxu0 0.0
    %374 = vmatpush1.xpose.msra.mxu0 %v345
    %375 = vmatprep.subr.mxu0 0.0
    %376 = vmatpush1.xpose.msra.mxu0 %v342
    %377 = vmatprep.subr.mxu0 0.0
    %378 = vmatpush1.xpose.msra.mxu0 %v339
    %379 = vmatprep.subr.mxu0 0.0
    %380 = vmatpush1.xpose.msra.mxu0 %v336
    %381 = vmatprep.subr.mxu0 0.0
    %382 = vmatpush1.xpose.msra.mxu0 %v333
    %383 = vmatprep.subr.mxu0 0.0
    %384 = vmatpush1.xpose.msra.mxu0 %v330
    %385 = vmatprep.subr.mxu0 0.0
    %386 = vmatpush2.xpose.msra.mxu0 0.0
    %387 = vmatprep.subr.mxu0 0.0
    %388 = vmatpush2.xpose.msra.mxu0 0.0
    %389 = vmatprep.subr.mxu0 0.0
    %390 = vmatpush2.xpose.msra.mxu0 0.0
    %391 = vmatprep.subr.mxu0 0.0
    %392 = vmatpush2.xpose.msra.mxu0 0.0
    %393 = vmatprep.subr.mxu0 0.0
    %394 = vmatpush2.xpose.msra.mxu0 0.0
    %395 = vmatprep.subr.mxu0 0.0
    %396 = vmatpush2.xpose.msra.mxu0 0.0
    %397 = vmatprep.subr.mxu0 0.0
    %398 = vmatpush2.xpose.msra.mxu0 0.0
    %399 = vmatprep.subr.mxu0 0.0
    %400 = vmatpush2.xpose.msra.mxu0 0.0
    %401 = vmatprep.subr.mxu0 0.0
    %402 = vmatpush2.xpose.msra.mxu0 0.0
    %403 = vmatprep.subr.mxu0 0.0
    %404 = vmatpush2.xpose.msra.mxu0 0.0
    %405 = vmatprep.subr.mxu0 0.0
    %406 = vmatpush2.xpose.msra.mxu0 0.0
    %407 = vmatprep.subr.mxu0 0.0
    %408 = vmatpush2.xpose.msra.mxu0 0.0
    %409 = vmatprep.subr.mxu0 0.0
    %410 = vmatpush2.xpose.msra.mxu0 0.0
    %411 = vmatprep.subr.mxu0 0.0
    %412 = vmatpush2.xpose.msra.mxu0 0.0
    %413 = vmatprep.subr.mxu0 0.0
    %414 = vmatpush2.xpose.msra.mxu0 0.0
    %415 = vmatprep.subr.mxu0 0.0
    %416 = vmatpush2.xpose.msra.mxu0 0.0
    %417 = vmatprep.mubr.f32.mxu0 0.0
    %418 = vmatmul.mubr.f32.gmra.mxu0 %v324
    %v419 = vpop.f32.mrf.mxu0
    %v420 = vadd.f32 %v315, %v419
    %v421 = vpop.f32.mrf.mxu0
    %422 = vmatprep.mubr.f32.mxu0 0.0
    %423 = vmatmul.mubr.f32.gmra.mxu0 %v327
    %v424 = vpop.f32.mrf.mxu0
    %v425 = vadd.f32 %v316, %v424
    %v426 = vpop.f32.mrf.mxu0
    %427 = vmatprep.mubr.f32.mxu0 0.0
    %428 = vmatmul.mubr.f32.gmra.mxu0 %v324
    %v429 = vpop.f32.mrf.mxu0
    %v430 = vadd.f32 %v317, %v429
    %v431 = vpop.f32.mrf.mxu0
    %432 = vmatprep.mubr.f32.mxu0 0.0
    %433 = vmatmul.mubr.f32.gmra.mxu0 %v327
    %v434 = vpop.f32.mrf.mxu0
    %v435 = vadd.f32 %v318, %v434
    %v436 = vpop.f32.mrf.mxu0
    %437 = vmatprep.mubr.f32.mxu0 0.0
    %438 = vmatmul.mubr.f32.gmra.mxu0 %v324
    %v439 = vpop.f32.mrf.mxu0
    %v440 = vadd.f32 %v319, %v439
    %v441 = vpop.f32.mrf.mxu0
    %442 = vmatprep.mubr.f32.mxu0 0.0
    %443 = vmatmul.mubr.f32.gmra.mxu0 %v327
    %v444 = vpop.f32.mrf.mxu0
    %v445 = vadd.f32 %v320, %v444
    %v446 = vpop.f32.mrf.mxu0
    %447 = vmatprep.mubr.f32.mxu0 0.0
    %448 = vmatmul.mubr.f32.gmra.mxu0 %v324
    %v449 = vpop.f32.mrf.mxu0
    %v450 = vadd.f32 %v321, %v449
    %v451 = vpop.f32.mrf.mxu0
    %452 = vmatprep.mubr.f32.mxu0 0.0
    %453 = vmatmul.mubr.f32.gmra.mxu0 %v327
    %v454 = vpop.f32.mrf.mxu0
    %v455 = vadd.f32 %v322, %v454
    %v456 = vpop.f32.mrf.mxu0
    %457 = vdwg.mxu0
    %vm458 = vcmask 523264
    %v459 = vsel %vm458, %v420, -inf
    %460 = vmax.xlane.f32.xlu0 %v459
    %v461 = vpop.xlane.xlu0 %460
    %v462 = vsel %vm458, %v425, -inf
    %463 = vmax.xlane.f32.xlu0 %v462
    %v464 = vpop.xlane.xlu0 %463
    %v465 = vsel %vm458, %v430, -inf
    %466 = vmax.xlane.f32.xlu0 %v465
    %v467 = vpop.xlane.xlu0 %466
    %v468 = vsel %vm458, %v435, -inf
    %469 = vmax.xlane.f32.xlu0 %v468
    %v470 = vpop.xlane.xlu0 %469
    %v471 = vsel %vm458, %v440, -inf
    %472 = vmax.xlane.f32.xlu0 %v471
    %v473 = vpop.xlane.xlu0 %472
    %v474 = vsel %vm458, %v445, -inf
    %475 = vmax.xlane.f32.xlu0 %v474
    %v476 = vpop.xlane.xlu0 %475
    %v477 = vsel %vm458, %v450, -inf
    %478 = vmax.xlane.f32.xlu0 %v477
    %v479 = vpop.xlane.xlu0 %478
    %v480 = vsel %vm458, %v455, -inf
    %481 = vmax.xlane.f32.xlu0 %v480
    %v482 = vpop.xlane.xlu0 %481
    %v483 = vsub.f32 %v420, %v461
    %v484 = vsub.f32 %v425, %v464
    %v485 = vsub.f32 %v430, %v467
    %v486 = vsub.f32 %v435, %v470
    %v487 = vsub.f32 %v440, %v473
    %v488 = vsub.f32 %v445, %v476
    %v489 = vsub.f32 %v450, %v479
    %v490 = vsub.f32 %v455, %v482
    %v491 = vmul.f32 %v483, 1.442695
    %v492 = vpow.pop %v491
    %v493 = vmul.f32 %v484, 1.442695
    %v494 = vpow.pop %v493
    %v495 = vmul.f32 %v485, 1.442695
    %v496 = vpow.pop %v495
    %v497 = vmul.f32 %v486, 1.442695
    %v498 = vpow.pop %v497
    %v499 = vmul.f32 %v487, 1.442695
    %v500 = vpow.pop %v499
    %v501 = vmul.f32 %v488, 1.442695
    %v502 = vpow.pop %v501
    %v503 = vmul.f32 %v489, 1.442695
    %v504 = vpow.pop %v503
    %v505 = vmul.f32 %v490, 1.442695
    %v506 = vpow.pop %v505
    %v507 = vsel %vm458, %v492, 0.0
    %508 = vadd.xlane.f32.xlu0 %v507
    %v509 = vpop.xlane.xlu0 %508
    %v510 = vsel %vm458, %v494, 0.0
    %511 = vadd.xlane.f32.xlu0 %v510
    %v512 = vpop.xlane.xlu0 %511
    %v513 = vsel %vm458, %v496, 0.0
    %514 = vadd.xlane.f32.xlu0 %v513
    %v515 = vpop.xlane.xlu0 %514
    %v516 = vsel %vm458, %v498, 0.0
    %517 = vadd.xlane.f32.xlu0 %v516
    %v518 = vpop.xlane.xlu0 %517
    %v519 = vsel %vm458, %v500, 0.0
    %520 = vadd.xlane.f32.xlu0 %v519
    %v521 = vpop.xlane.xlu0 %520
    %v522 = vsel %vm458, %v502, 0.0
    %523 = vadd.xlane.f32.xlu0 %v522
    %v524 = vpop.xlane.xlu0 %523
    %v525 = vsel %vm458, %v504, 0.0
    %526 = vadd.xlane.f32.xlu0 %v525
    %v527 = vpop.xlane.xlu0 %526
    %v528 = vsel %vm458, %v506, 0.0
    %529 = vadd.xlane.f32.xlu0 %v528
    %v530 = vpop.xlane.xlu0 %529
    %v531 = vrcp.pop %v509
    %v532 = vrcp.pop %v512
    %v533 = vrcp.pop %v515
    %v534 = vrcp.pop %v518
    %v535 = vrcp.pop %v521
    %v536 = vrcp.pop %v524
    %v537 = vrcp.pop %v527
    %v538 = vrcp.pop %v530
    %v539 = vmul.f32 %v492, %v531
    %v540 = vmul.f32 %v494, %v532
    %v541 = vmul.f32 %v496, %v533
    %v542 = vmul.f32 %v498, %v534
    %v543 = vmul.f32 %v500, %v535
    %v544 = vmul.f32 %v502, %v536
    %v545 = vmul.f32 %v504, %v537
    %v546 = vmul.f32 %v506, %v538
    %555 = vrot.lane.b32.xlu0 %v307, 96
    %v556 = vpop.permute.xlu0 %555
    %557 = vrot.lane.b32.xlu0 %v308, 96
    %v558 = vpop.permute.xlu0 %557
    %559 = vrot.lane.b32.xlu0 %v309, 96
    %v560 = vpop.permute.xlu0 %559
    %561 = vrot.lane.b32.xlu0 %v310, 96
    %v562 = vpop.permute.xlu0 %561
    %563 = vrot.lane.b32.xlu0 %v311, 96
    %v564 = vpop.permute.xlu0 %563
    %565 = vrot.lane.b32.xlu0 %v312, 96
    %v566 = vpop.permute.xlu0 %565
    %567 = vrot.lane.b32.xlu0 %v313, 96
    %v568 = vpop.permute.xlu0 %567
    %569 = vrot.lane.b32.xlu0 %v314, 96
    %v570 = vpop.permute.xlu0 %569
    %v580 = vsel %vm458, %v539, 0
    %v583 = vsel %vm458, %v540, 0
    %v586 = vsel %vm458, %v541, 0
    %v589 = vsel %vm458, %v542, 0
    %v592 = vsel %vm458, %v543, 0
    %v595 = vsel %vm458, %v544, 0
    %v598 = vsel %vm458, %v545, 0
    %v601 = vsel %vm458, %v546, 0
    %603 = vmatprep.subr.mxu0 0.0
    %604 = vmatpush1.msra.mxu0 0.0
    %605 = vmatprep.subr.mxu0 0.0
    %606 = vmatpush1.msra.mxu0 0.0
    %607 = vmatprep.subr.mxu0 0.0
    %608 = vmatpush1.msra.mxu0 0.0
    %609 = vmatprep.subr.mxu0 0.0
    %610 = vmatpush1.msra.mxu0 0.0
    %611 = vmatprep.subr.mxu0 0.0
    %612 = vmatpush1.msra.mxu0 0.0
    %613 = vmatprep.subr.mxu0 0.0
    %614 = vmatpush1.msra.mxu0 0.0
    %615 = vmatprep.subr.mxu0 0.0
    %616 = vmatpush1.msra.mxu0 0.0
    %617 = vmatprep.subr.mxu0 0.0
    %618 = vmatpush1.msra.mxu0 0.0
    %619 = vmatprep.subr.mxu0 0.0
    %620 = vmatpush1.msra.mxu0 %v570
    %621 = vmatprep.subr.mxu0 0.0
    %622 = vmatpush1.msra.mxu0 %v568
    %623 = vmatprep.subr.mxu0 0.0
    %624 = vmatpush1.msra.mxu0 %v566
    %625 = vmatprep.subr.mxu0 0.0
    %626 = vmatpush1.msra.mxu0 %v564
    %627 = vmatprep.subr.mxu0 0.0
    %628 = vmatpush1.msra.mxu0 %v562
    %629 = vmatprep.subr.mxu0 0.0
    %630 = vmatpush1.msra.mxu0 %v560
    %631 = vmatprep.subr.mxu0 0.0
    %632 = vmatpush1.msra.mxu0 %v558
    %633 = vmatprep.subr.mxu0 0.0
    %634 = vmatpush1.msra.mxu0 %v556
    %635 = vmatprep.subr.mxu0 0.0
    %636 = vmatpush2.msra.mxu0 0.0
    %637 = vmatprep.subr.mxu0 0.0
    %638 = vmatpush2.msra.mxu0 0.0
    %639 = vmatprep.subr.mxu0 0.0
    %640 = vmatpush2.msra.mxu0 0.0
    %641 = vmatprep.subr.mxu0 0.0
    %642 = vmatpush2.msra.mxu0 0.0
    %643 = vmatprep.subr.mxu0 0.0
    %644 = vmatpush2.msra.mxu0 0.0
    %645 = vmatprep.subr.mxu0 0.0
    %646 = vmatpush2.msra.mxu0 0.0
    %647 = vmatprep.subr.mxu0 0.0
    %648 = vmatpush2.msra.mxu0 0.0
    %649 = vmatprep.subr.mxu0 0.0
    %650 = vmatpush2.msra.mxu0 0.0
    %651 = vmatprep.subr.mxu0 0.0
    %652 = vmatpush2.msra.mxu0 0.0
    %653 = vmatprep.subr.mxu0 0.0
    %654 = vmatpush2.msra.mxu0 0.0
    %655 = vmatprep.subr.mxu0 0.0
    %656 = vmatpush2.msra.mxu0 0.0
    %657 = vmatprep.subr.mxu0 0.0
    %658 = vmatpush2.msra.mxu0 0.0
    %659 = vmatprep.subr.mxu0 0.0
    %660 = vmatpush2.msra.mxu0 0.0
    %661 = vmatprep.subr.mxu0 0.0
    %662 = vmatpush2.msra.mxu0 0.0
    %663 = vmatprep.subr.mxu0 0.0
    %664 = vmatpush2.msra.mxu0 0.0
    %665 = vmatprep.subr.mxu0 0.0
    %666 = vmatpush2.msra.mxu0 0.0
    %667 = vmatprep.mubr.f32.mxu0 0.0
    %668 = vmatmul.mubr.f32.gmra.mxu0 %v580
    %v669 = vpop.f32.mrf.mxu0
    %v670 = vadd.f32 0.0, %v669
    %v671 = vpop.f32.mrf.mxu0
    %672 = vmatprep.mubr.f32.mxu0 0.0
    %673 = vmatmul.mubr.f32.gmra.mxu0 %v583
    %v674 = vpop.f32.mrf.mxu0
    %v675 = vadd.f32 0.0, %v674
    %v676 = vpop.f32.mrf.mxu0
    %677 = vmatprep.mubr.f32.mxu0 0.0
    %678 = vmatmul.mubr.f32.gmra.mxu0 %v586
    %v679 = vpop.f32.mrf.mxu0
    %v680 = vadd.f32 0.0, %v679
    %v681 = vpop.f32.mrf.mxu0
    %682 = vmatprep.mubr.f32.mxu0 0.0
    %683 = vmatmul.mubr.f32.gmra.mxu0 %v589
    %v684 = vpop.f32.mrf.mxu0
    %v685 = vadd.f32 0.0, %v684
    %v686 = vpop.f32.mrf.mxu0
    %687 = vmatprep.mubr.f32.mxu0 0.0
    %688 = vmatmul.mubr.f32.gmra.mxu0 %v592
    %v689 = vpop.f32.mrf.mxu0
    %v690 = vadd.f32 0.0, %v689
    %v691 = vpop.f32.mrf.mxu0
    %692 = vmatprep.mubr.f32.mxu0 0.0
    %693 = vmatmul.mubr.f32.gmra.mxu0 %v595
    %v694 = vpop.f32.mrf.mxu0
    %v695 = vadd.f32 0.0, %v694
    %v696 = vpop.f32.mrf.mxu0
    %697 = vmatprep.mubr.f32.mxu0 0.0
    %698 = vmatmul.mubr.f32.gmra.mxu0 %v598
    %v699 = vpop.f32.mrf.mxu0
    %v700 = vadd.f32 0.0, %v699
    %v701 = vpop.f32.mrf.mxu0
    %702 = vmatprep.mubr.f32.mxu0 0.0
    %703 = vmatmul.mubr.f32.gmra.mxu0 %v601
    %v704 = vpop.f32.mrf.mxu0
    %v705 = vadd.f32 0.0, %v704
    %v706 = vpop.f32.mrf.mxu0
    %707 = vdwg.mxu0
    %v708 = vadd.f32 %v670, %v680
    %v709 = vadd.f32 %v675, %v685
    %v710 = vadd.f32 %v708, %v690
    %v711 = vadd.f32 %v709, %v695
    %v712 = vadd.f32 %v710, %v700
    %v713 = vadd.f32 %v711, %v705
    %714 = vst.msk [vmem:[#allocation2] sm:$0xff] %vm45, %v712
    %715 = vst.msk [vmem:[#allocation2 + $0x8] sm:$0xff] %vm45, %v713
    // Predicated region
    $region34: #{tpu_custom_call.1} parent=1 // pred_check
      _
    $region35: #{tpu_custom_call.1} parent=1 // pred_check_branch
      %717 = sbr.rel (0) target = $region37
    $region36: #{tpu_custom_call.1} parent=1 // pred_region
      %s719 = ssub.s32 256, 256
      %720 = vsyncadd [#allocation3], %s719
      %s721 = sshll.u32 [#allocation2], 4
      %s722 = int_to_ptr.vmem [resolvable:$true] %s721
      %727 = dma.vmem_to_hbm [thread:$0]  %s722, 256, %s8, [#allocation3], 128, 128, 8
    $region37: #{tpu_custom_call.1} parent=1 // pred_fallthru
      _
    // Predicated region
    $region38: #{tpu_custom_call.1} parent=1 // pred_check
      _
    $region39: #{tpu_custom_call.1} parent=1 // pred_check_branch
      %729 = sbr.rel (0) target = $region41
    $region40: #{tpu_custom_call.1} parent=1 // pred_region
      %730 = dma.done [#allocation3], 256
    $region41: #{tpu_custom_call.1} parent=1 // pred_fallthru
      _
    %731 = vsyncpa [#allocation3], 1

</llo_original>
